<compile_context>
chip_gen: v6e
topology: v6e:2x2x1
jax: 0.10.0
libtpu: 0.0.40
codegen_flags: <defaults>
</compile_context>

<pallas_src>
import jax
import jax.numpy as jnp
from jax.experimental import pallas as pl
from jax.experimental.pallas import tpu as pltpu


def _unembed_kernel(x_ref, o_ref):
    # x_ref: (TL, C) tile in VMEM; o_ref: (C, TL) tile in VMEM.
    # Single clean 2-D transpose -> XLU vxpose on (8,128) tiles.
    o_ref[...] = x_ref[...].T


def _choose_l_tile(L, C, itemsize, vmem_budget_bytes=8 * 1024 * 1024,
                   max_tl=2048):
    """Largest multiple of 128 dividing L, under a per-step VMEM budget.

    Per-step VMEM ~= 4 * TL * C * itemsize (double-buffered input + output
    tiles).  Budget is conservative for all of v5e/v6e/v7x scoped-VMEM
    defaults.  Falls back to the full L (legal full-extent block) when no
    128-multiple divides L (e.g. very small feature maps).
    """
    cap = max(128, vmem_budget_bytes // (4 * max(C, 1) * itemsize))
    cap = min(cap, max_tl, L)
    best = None
    tl = 128
    while tl <= cap:
        if L % tl == 0:
            best = tl
        tl += 128
    return best if best is not None else L


def patch_unembed(x, x_size, embed_dim, *, tl=None):
    """PatchUnEmbed.forward: (B, L, C) -> (B, C, H, W) with L == H*W, C == embed_dim."""
    B, L, C = x.shape
    H, W = x_size
    assert L == H * W, f"L={L} must equal H*W={H * W}"
    assert C == embed_dim, f"C={C} must equal embed_dim={embed_dim}"

    itemsize = jnp.dtype(x.dtype).itemsize
    if tl is None:
        tl = _choose_l_tile(L, C, itemsize)
    assert L % tl == 0, f"L tile {tl} must divide L={L}"
    n_l_tiles = L // tl

    out_bcl = pl.pallas_call(
        _unembed_kernel,
        out_shape=jax.ShapeDtypeStruct((B, C, L), x.dtype),
        grid_spec=pltpu.PrefetchScalarGridSpec(
            num_scalar_prefetch=0,
            grid=(B, n_l_tiles),
            in_specs=[
                pl.BlockSpec((pl.Squeezed(), tl, C),
                             lambda b, l: (b, l, 0)),
            ],
            out_specs=pl.BlockSpec((pl.Squeezed(), C, tl),
                                   lambda b, l: (b, 0, l)),
        ),
        compiler_params=pltpu.CompilerParams(
            dimension_semantics=("parallel", "parallel")),
        cost_estimate=pl.CostEstimate(
            flops=0,
            transcendentals=0,
            bytes_accessed=2 * B * L * C * itemsize),
    )(x)

    # Glue: (B, C, L) -> (B, C, H, W). Row-major reshape, zero data movement.
    return out_bcl.reshape(B, C, H, W)


if __name__ == "__main__":
    key = jax.random.PRNGKey(0)

    # Case 1: small shapes consistent with the module
    # (batch=2, embed_dim=32, 8x8 feature map -> L=64 tokens; L<128 so the
    # full-extent fallback path is exercised).
    B, H, W, C = 2, 8, 8, 32
    L = H * W
    x = jax.random.normal(key, (B, L, C), dtype=jnp.float32)
    out = jax.block_until_ready(patch_unembed(x, (H, W), embed_dim=C))
    ref = jnp.swapaxes(x, 1, 2).reshape(B, C, H, W)
    assert out.shape == (B, C, H, W)
    assert jnp.array_equal(out, ref)

    # Case 2: tiled-L path (L=256 split into lane-dense 128-wide output tiles,
    # non-128-multiple embed_dim=96 kept full-extent on the C axis).
    B2, H2, W2, C2 = 2, 16, 16, 96
    L2 = H2 * W2
    x2 = jax.random.normal(jax.random.PRNGKey(0), (B2, L2, C2),
                           dtype=jnp.float32)
    out2 = jax.block_until_ready(
        patch_unembed(x2, (H2, W2), embed_dim=C2, tl=128))
    ref2 = jnp.swapaxes(x2, 1, 2).reshape(B2, C2, H2, W2)
    assert out2.shape == (B2, C2, H2, W2)
    assert jnp.array_equal(out2, ref2)

    # Case 3: bf16 (packed sublane layout) with auto tile choice.
    B3, H3, W3, C3 = 1, 16, 16, 64
    L3 = H3 * W3
    x3 = jax.random.normal(jax.random.PRNGKey(0), (B3, L3, C3),
                           dtype=jnp.bfloat16)
    out3 = jax.block_until_ready(patch_unembed(x3, (H3, W3), embed_dim=C3))
    ref3 = jnp.swapaxes(x3, 1, 2).reshape(B3, C3, H3, W3)
    assert out3.shape == (B3, C3, H3, W3)
    assert jnp.array_equal(out3, ref3)

    print("KERNEL_OK")
</pallas_src>

<mosaic_0001>
module attributes {stable_mosaic.version = 11 : i64} {
  func.func @_unembed_kernel(%arg0: i32, %arg1: i32, %arg2: memref<1x64x32xf32, #tpu.memory_space<vmem>>, %arg3: memref<1x32x64xf32, #tpu.memory_space<vmem>>) attributes {dimension_semantics = [#tpu.dimension_semantics<parallel>, #tpu.dimension_semantics<parallel>], iteration_bounds = array<i64: 2, 1>, scalar_prefetch = 0 : i64, scratch_operands = 0 : i64, tpu.core_type = #tpu.core_type<tc>, window_params = [{transform_indices = @transform_0, window_bounds = array<i64: 1, 64, 32>}, {transform_indices = @transform_1, window_bounds = array<i64: 1, 32, 64>}]} {
    %c0 = arith.constant 0 : index
    %c0_0 = arith.constant 0 : index
    %c0_1 = arith.constant 0 : index
    %0 = vector.load %arg2[%c0, %c0_0, %c0_1] : memref<1x64x32xf32, #tpu.memory_space<vmem>>, vector<1x64x32xf32>
    %1 = vector.shape_cast %0 : vector<1x64x32xf32> to vector<64x32xf32>
    %2 = tpu.transpose %1, [1, 0] : vector<64x32xf32> -> vector<32x64xf32>
    %c0_2 = arith.constant 0 : index
    %c0_3 = arith.constant 0 : index
    %c0_4 = arith.constant 0 : index
    %3 = vector.load %arg3[%c0_2, %c0_3, %c0_4] : memref<1x32x64xf32, #tpu.memory_space<vmem>>, vector<1x32x64xf32>
    %4 = vector.shape_cast %3 : vector<1x32x64xf32> to vector<32x64xf32>
    %5 = vector.shape_cast %2 : vector<32x64xf32> to vector<1x32x64xf32>
    tpu.vector_store %arg3[%c0_2, %c0_3, %c0_4], %5 {strides = array<i32>} : memref<1x32x64xf32, #tpu.memory_space<vmem>>, vector<1x32x64xf32>,
    return
  }
  func.func @transform_0(%arg0: i32, %arg1: i32) -> (i32, i32, i32) {
    %c0_i32 = arith.constant 0 : i32
    %c0_i32_0 = arith.constant 0 : i32
    return %arg0, %arg1, %c0_i32 : i32, i32, i32
  }
  func.func @transform_1(%arg0: i32, %arg1: i32) -> (i32, i32, i32) {
    %c0_i32 = arith.constant 0 : i32
    %c0_i32_0 = arith.constant 0 : i32
    return %arg0, %c0_i32, %arg1 : i32, i32, i32
  }
}

</mosaic_0001>

<llo_original>
// kernel: tpu_custom_call.1
$region0: #{tpu_custom_call.1}
  #allocation0 [shape = 'u32[]', space=smem, size = 0x4, offset = 0x4, fixed_abs, tag = 'smem constant byte address 0x4 - core index']
  #allocation1 [shape = 'u32[144,128]{1,0:T(1,128)}', space=vmem, size = 0x12000, scoped, tag = 'internal scratch']
  %s0 = inlined_call_operand.vmem [shape: f32[2,64,32], index: 0, kind: input, shape index: {}]
  %s1 = inlined_call_operand.hbm [shape: f32[2,32,64], index: 1, kind: output, shape index: {}]
  %s2 = sld [smem:[#allocation0]]
  $region37: #{tpu_custom_call.1} parent=0
    _
  %s4 = ssub.s32 1, %s2
  %s5 = scalar_select 0, %s4, %s2
  $region1: #{tpu_custom_call.1} parent=0
    #allocation2 [shape = 'u8[32768]{0}', space=vmem, size = 0x8000, scoped, tag = 'output window, operand 0']
    #allocation3 [shape = 's32[2]{0}', space=sflag, size = 0x8, scoped, tag = 'scoped memory for tpu_custom_call.1']
    %6 = vsyncpa [#allocation3], 0
    %s7 = scalar_lea.sflag [#allocation3], 1
    %8 = vsyncpa %s7, 0
    loop: start=0, step=1, limit=4
    $region2: #{tpu_custom_call.1} parent=1 // loop_pre_header
      _
    $region3: #{tpu_custom_call.1} parent=1 // loop_header
      %s10 = sphi 0, %s14
      %p11 = scmp.ge.s32.totalorder %s10, 4
      %s17 = sphi 0, %s29
      %s18 = sphi 0, %s25
      %s19 = sphi 0, %s17
      %s20 = sphi 0, %s18
      %s21 = sphi 0, %s19
      %s22 = sphi 0, %s20
      %s34 = sphi 0, %s36
      %s37 = sphi 0, %s34
      %s38 = sphi 0, %s37
      %s54 = sphi 0, %s38
      %s62 = sphi 0, %s64
      %s65 = sphi 0, %s62
      %s66 = sphi 0, %s65
      %s82 = sphi 0, %s66
    $region4: #{tpu_custom_call.1} parent=1 // loop_header_branch
      %13 = sbr.rel (%p11) target = $region8
    $region5: #{tpu_custom_call.1} parent=1 // loop_body
      %s15 = ssub.s32 %s10, 1
      %s16 = ssub.s32 %s10, 2
      %s23 = sadd.s32 1, %s18
      %p24 = scmp.ge.s32.totalorder %s23, 1
      %s25 = scalar_select %p24, 0, %s23
      %s26 = sadd.s32 1, %s17
      %s27 = scalar_select %p24, %s26, %s17
      %p28 = scmp.ge.s32.totalorder %s27, 2
      %s29 = scalar_select %p28, 0, %s27
      %s30 = ssub.s32 %s17, %s29
      %s31 = ssub.s32 %s18, %s25
      %s32 = sor.u32 %s30, %s31
      %p33 = scmp.eq.s32.totalorder %s32, 0
      %s35 = sadd.s32 %s34, 1
      %s36 = scalar_select %p33, %s34, %s35
      %p39 = pneg %p33
      %p40 = scmp.eq.s32.totalorder %s10, 1
      %p41 = por %p39, %p40
      %p42 = scmp.ne.s32.totalorder %s34, %s37
      %p43 = scmp.eq.s32.totalorder %s10, 0
      %p44 = por %p42, %p43
      %p45 = scmp.ne.s32.totalorder %s34, %s37
      %p46 = scmp.eq.s32.totalorder %s15, 1
      %p47 = por %p45, %p46
      %p48 = scmp.ne.s32.totalorder %s37, %s38
      %p49 = scmp.eq.s32.totalorder %s15, 0
      %p50 = por %p48, %p49
      %p51 = scmp.ne.s32.totalorder %s37, %s38
      %p52 = scmp.eq.s32.totalorder %s16, 1
      %p53 = por %p51, %p52
      %p55 = scmp.ne.s32.totalorder %s38, %s54
      %p56 = scmp.eq.s32.totalorder %s16, 0
      %p57 = por %p55, %p56
      %s58 = ssub.s32 %s17, %s29
      %s59 = ssub.s32 %s18, %s25
      %s60 = sor.u32 %s58, %s59
      %p61 = scmp.eq.s32.totalorder %s60, 0
      %s63 = sadd.s32 %s62, 1
      %s64 = scalar_select %p61, %s62, %s63
      %p67 = pneg %p61
      %p68 = scmp.eq.s32.totalorder %s10, 1
      %p69 = por %p67, %p68
      %p70 = scmp.ne.s32.totalorder %s62, %s65
      %p71 = scmp.eq.s32.totalorder %s10, 0
      %p72 = por %p70, %p71
      %p73 = scmp.ne.s32.totalorder %s62, %s65
      %p74 = scmp.eq.s32.totalorder %s15, 1
      %p75 = por %p73, %p74
      %p76 = scmp.ne.s32.totalorder %s65, %s66
      %p77 = scmp.eq.s32.totalorder %s15, 0
      %p78 = por %p76, %p77
      %p79 = scmp.ne.s32.totalorder %s65, %s66
      %p80 = scmp.eq.s32.totalorder %s16, 1
      %p81 = por %p79, %p80
      %p83 = scmp.ne.s32.totalorder %s66, %s82
      %p84 = scmp.eq.s32.totalorder %s16, 0
      %p85 = por %p83, %p84
      %p86 = scmp.le.s32.totalorder 1, %s10
      %p87 = scmp.lt.s32.totalorder %s10, 3
      %p88 = pnand %p86, %p87
      %p89 = pneg %p88
      // Predicated region
      $region9: #{tpu_custom_call.1} parent=5 // pred_check
        _
      $region10: #{tpu_custom_call.1} parent=5 // pred_check_branch
        %91 = sbr.rel (%p88) target = $region12
      $region11: #{tpu_custom_call.1} parent=5 // pred_region
        %s92 = ssub.s32 %s10, 1
      $region12: #{tpu_custom_call.1} parent=5 // pred_fallthru
        _
      %p93 = scmp.lt.s32.totalorder %s10, 2
      // Predicated region
      $region13: #{tpu_custom_call.1} parent=5 // pred_check
        %p94 = pneg %p93
      $region14: #{tpu_custom_call.1} parent=5 // pred_check_branch
        %96 = sbr.rel (%p94) target = $region16
      $region15: #{tpu_custom_call.1} parent=5 // pred_region
        // Predicated region
        $region17: #{tpu_custom_call.1} parent=15 // pred_check
          %p97 = pneg %p44
        $region18: #{tpu_custom_call.1} parent=15 // pred_check_branch
          %99 = sbr.rel (%p97) target = $region20
        $region19: #{tpu_custom_call.1} parent=15 // pred_region
          %s100 = smul.u32 8, %s18
          %p101 = scmp.lt.s32.totalorder %s17, 1
          %s102 = scalar_select %p101, %s17, 1
          %p103 = scmp.lt.s32.totalorder %s100, 7
          %s104 = scalar_select %p103, %s100, 7
          %s105 = smul.addr %s102, 8
          %s106 = sadd.s32 %s104, %s105
          %s107 = smul.addr %s106, 8
          %s108 = scalar_lea.vmem %s0, %s107
          %s109 = smul.u32 8, %s18
        $region20: #{tpu_custom_call.1} parent=15 // pred_fallthru
          _
      $region16: #{tpu_custom_call.1} parent=5 // pred_fallthru
        _
      %p110 = scmp.le.s32.totalorder 1, %s10
      %p111 = scmp.lt.s32.totalorder %s10, 3
      %p112 = pnand %p110, %p111
      %p113 = pneg %p112
      // Predicated region
      $region21: #{tpu_custom_call.1} parent=5 // pred_check
        _
      $region22: #{tpu_custom_call.1} parent=5 // pred_check_branch
        %115 = sbr.rel (%p112) target = $region24
      $region23: #{tpu_custom_call.1} parent=5 // pred_region
        %s116 = ssub.s32 %s10, 1
        %s117 = smul.u32 8, %s20
        %p118 = scmp.lt.s32.totalorder %s19, 1
        %s119 = scalar_select %p118, %s19, 1
        %p120 = scmp.lt.s32.totalorder %s117, 7
        %s121 = scalar_select %p120, %s117, 7
        %s122 = smul.addr %s119, 8
        %s123 = sadd.s32 %s121, %s122
        %s124 = smul.addr %s123, 8
        %s125 = scalar_lea.vmem %s0, %s124
        %p126 = pneg %p50
        %p127 = pneg %p47
        %p128 = pneg %p78
        %p129 = pneg %p75
        %s130 = sand.u32 %s65, 1
        %s131 = scalar_lea.sflag [#allocation3], %s130
        %s132 = sand.u32 %s65, 1
        %s133 = smul.addr %s132, 32
        %s134 = scalar_lea.vmem [#allocation2], %s133
        %s135 = smul.u32 8, %s20
        %p136 = scmp.lt.s32.totalorder %s19, 1
        %s137 = scalar_select %p136, %s19, 1
        %p138 = scmp.lt.s32.totalorder %s135, 7
        %s139 = scalar_select %p138, %s135, 7
        %s140 = smul.addr %s137, 8
        %s141 = sadd.s32 %s139, %s140
        %s142 = smul.addr %s141, 8
        %s143 = scalar_lea.vmem %s0, %s142
        %s144 = smul.u32 8, %s20
        %v145 = vld [vmem:[%s143] sm:$0xff]
        %v146 = vld [vmem:[%s143 + $0x8] sm:$0xff]
        %v147 = vld [vmem:[%s143 + $0x10] sm:$0xff]
        %v148 = vld [vmem:[%s143 + $0x18] sm:$0xff]
        %v149 = vld [vmem:[%s143 + $0x20] sm:$0xff]
        %v150 = vld [vmem:[%s143 + $0x28] sm:$0xff]
        %v151 = vld [vmem:[%s143 + $0x30] sm:$0xff]
        %v152 = vld [vmem:[%s143 + $0x38] sm:$0xff]
        %153 = vxpose.xlu0.b32.start [1/16] %v145, 128
        %154 = vxpose.xlu0.b32.cont [2/16] %v146, 128
        %155 = vxpose.xlu0.b32.cont [3/16] %v147, 128
        %156 = vxpose.xlu0.b32.cont [4/16] %v148, 128
        %157 = vxpose.xlu0.b32.cont [5/16] %v149, 128
        %158 = vxpose.xlu0.b32.cont [6/16] %v150, 128
        %159 = vxpose.xlu0.b32.cont [7/16] %v151, 128
        %160 = vxpose.xlu0.b32.cont [8/16] %v152, 128
        %161 = vxpose.xlu0.b32.cont [9/16] 0.0, 128
        %162 = vxpose.xlu0.b32.cont [10/16] 0.0, 128
        %163 = vxpose.xlu0.b32.cont [11/16] 0.0, 128
        %164 = vxpose.xlu0.b32.cont [12/16] 0.0, 128
        %165 = vxpose.xlu0.b32.cont [13/16] 0.0, 128
        %166 = vxpose.xlu0.b32.cont [14/16] 0.0, 128
        %167 = vxpose.xlu0.b32.cont [15/16] 0.0, 128
        %168 = vxpose.xlu0.b32.end [16/16] 0.0, 128
        %v169 = vpop.trf.xlu0
        %v170 = vpop.trf.xlu0
        %v171 = vpop.trf.xlu0
        %v172 = vpop.trf.xlu0
        %v173 = vpop.trf.xlu0
        %v174 = vpop.trf.xlu0
        %v175 = vpop.trf.xlu0
        %v176 = vpop.trf.xlu0
        %v177 = vpop.trf.xlu0
        %v178 = vpop.trf.xlu0
        %v179 = vpop.trf.xlu0
        %v180 = vpop.trf.xlu0
        %v181 = vpop.trf.xlu0
        %v182 = vpop.trf.xlu0
        %v183 = vpop.trf.xlu0
        %v184 = vpop.trf.xlu0
        %vm185 = vcmask 523264
        %186 = vst.msk [vmem:[%s134] sm:$0xff] %vm185, %v169
        %187 = vst.msk [vmem:[%s134 + $0x8] sm:$0xff] %vm185, %v170
        %188 = vst.msk [vmem:[%s134 + $0x10] sm:$0xff] %vm185, %v171
        %189 = vst.msk [vmem:[%s134 + $0x18] sm:$0xff] %vm185, %v172
        %s190 = sand.u32 %s65, 1
        %s191 = scalar_lea.sflag [#allocation3], %s190
        %s192 = sand.u32 %s65, 1
        %s193 = smul.addr %s192, 32
        %s194 = scalar_lea.vmem [#allocation2], %s193
        // Predicated region
        $region25: #{tpu_custom_call.1} parent=23 // pred_check
          %p195 = pneg %p75
        $region26: #{tpu_custom_call.1} parent=23 // pred_check_branch
          %197 = sbr.rel (%p195) target = $region28
        $region27: #{tpu_custom_call.1} parent=23 // pred_region
          %s199 = ssub.s32 512, 512
          %200 = vsyncadd %s191, %s199
          %s201 = smul.addr %s19, 4
          %s202 = sadd.s32 %s20, %s201
          %s203 = smul.addr %s202, 128
          %s204 = scalar_lea.hbm %s1, %s203
          %s205 = sshll.u32 %s194, 4
          %s206 = int_to_ptr.vmem [resolvable:$true] %s205
          %211 = dma.vmem_to_hbm [thread:$0]  %s206, 512, %s204, %s191, 128, 128, 8
        $region28: #{tpu_custom_call.1} parent=23 // pred_fallthru
          _
      $region24: #{tpu_custom_call.1} parent=5 // pred_fallthru
        _
      %p212 = scmp.le.s32.totalorder 2, %s10
      // Predicated region
      $region29: #{tpu_custom_call.1} parent=5 // pred_check
        %p213 = pneg %p212
      $region30: #{tpu_custom_call.1} parent=5 // pred_check_branch
        %215 = sbr.rel (%p213) target = $region32
      $region31: #{tpu_custom_call.1} parent=5 // pred_region
        %s216 = ssub.s32 %s10, 2
        // Predicated region
        $region33: #{tpu_custom_call.1} parent=31 // pred_check
          %p217 = pneg %p81
        $region34: #{tpu_custom_call.1} parent=31 // pred_check_branch
          %219 = sbr.rel (%p217) target = $region36
        $region35: #{tpu_custom_call.1} parent=31 // pred_region
          %s220 = sand.u32 %s66, 1
          %s221 = scalar_lea.sflag [#allocation3], %s220
          %s222 = sand.u32 %s66, 1
          %s223 = smul.addr %s222, 32
          %s224 = scalar_lea.vmem [#allocation2], %s223
          %225 = dma.done %s221, 512
        $region36: #{tpu_custom_call.1} parent=31 // pred_fallthru
          _
      $region32: #{tpu_custom_call.1} parent=5 // pred_fallthru
        _
    $region6: #{tpu_custom_call.1} parent=1 // loop_footer
      %s14 = sadd.s32 1, %s10
    $region7: #{tpu_custom_call.1} parent=1 // loop_footer_branch
      %9 = sbr.rel target = $region3
    $region8: #{tpu_custom_call.1} parent=1 // loop_exit
      _
    %226 = vsyncpa [#allocation3], 1
    %s227 = scalar_lea.sflag [#allocation3], 1
    %228 = vsyncpa %s227, 1

</llo_original>
